<compile_context>
chip_gen: v5e
topology: v5e:2x2
jax: 0.10.0
libtpu: 0.0.40
codegen_flags: <defaults>
</compile_context>

<pallas_src>
import jax
import jax.numpy as jnp
import numpy as np
from jax.experimental import pallas as pl
from jax.experimental.pallas import tpu as pltpu

_DIMS = [(2, 16), (16, 32), (32, 16), (16, 8), (8, 2)]
_NLAYERS = len(_DIMS)
_FMAX = 32          # max feature width; everything padded to 32
_LANE = 128         # lane width / batch-tile granularity


def _round_up(x, m):
    return ((x + m - 1) // m) * m


def _generator_kernel(z_ref, wp_ref, bp_ref, aff_ref, o_ref):
    # z_ref:   [2, TB]      latent, batch on the lane axis
    # wp_ref:  [5, 32, 32]  zero-padded f32 weights, layer-major, stored [out, in]
    # bp_ref:  [5, 32, 1]   zero-padded f32 biases
    # aff_ref: [2, 2]       col 0 = scale, col 1 = offset (map_to_range)
    # o_ref:   [2, TB]
    x = z_ref[...]                                        # [2, TB] f32

    # Layer 1 (fan_in=2): a K=2 MXU matmul would waste a whole MXU pass and
    # needs a sub-(8,128) [32,2] operand, so do it on the (otherwise idle)
    # VPU as two outer-product FMAs. Padded rows (16..31) stay exactly 0.
    w1 = wp_ref[0]                                        # [32, 32] f32
    h = w1[:, 0:1] * x[0:1, :] + w1[:, 1:2] * x[1:2, :] + bp_ref[0]   # [32, TB]
    h = jnp.maximum(h, 0.2 * h)                           # LeakyReLU(0.2)

    # Layers 2..5: uniform zero-padded [32,32] @ [32,TB] matmuls with bf16
    # MXU operands and f32 accumulation. Padded rows stay exactly 0
    # (zero weight rows + zero bias + LeakyReLU(0) == 0), so padding is inert.
    for l in range(1, _NLAYERS):
        w_bf = wp_ref[l].astype(jnp.bfloat16)             # tiny 32x32 cast
        h = jnp.dot(w_bf, h.astype(jnp.bfloat16),
                    preferred_element_type=jnp.float32) + bp_ref[l]
        h = jnp.maximum(h, 0.2 * h)

    y = jnp.tanh(h[:2, :])                                # [2, TB] (EUP)
    scale = aff_ref[:, 0:1]                               # [2, 1]
    offset = aff_ref[:, 1:2]                              # [2, 1]
    o_ref[...] = (y * scale + offset).astype(o_ref.dtype)


def init_params(key):
    """PyTorch-style nn.Linear init: U(-1/sqrt(fan_in), 1/sqrt(fan_in))."""
    params = []
    for (fan_in, fan_out) in _DIMS:
        key, kw, kb = jax.random.split(key, 3)
        bound = 1.0 / np.sqrt(fan_in)
        w = jax.random.uniform(kw, (fan_in, fan_out), jnp.float32, -bound, bound)
        b = jax.random.uniform(kb, (1, fan_out), jnp.float32, -bound, bound)
        params.append((w, b))
    return params


def pack_params(params):
    """Pack 5 (W[in,out], b[1,out]) pairs into one padded weight/bias tensor."""
    wp = jnp.zeros((_NLAYERS, _FMAX, _FMAX), jnp.float32)
    bp = jnp.zeros((_NLAYERS, _FMAX, 1), jnp.float32)
    for l, (w, b) in enumerate(params):
        fi, fo = w.shape
        wp = wp.at[l, :fo, :fi].set(w.T)          # stored as [out, in]
        bp = bp.at[l, :fo, 0].set(b.reshape(-1))
    return wp, bp


def _make_affine(ranges):
    """map_to_range folded into the kernel epilogue: y*scale + offset."""
    if ranges is not None and len(ranges) > 0:
        r = jnp.asarray(ranges, jnp.float32)
        lo, hi = r[:, 0], r[:, 1]
        scale = (hi - lo) * 0.5
        offset = (hi + lo) * 0.5
    else:
        scale = jnp.ones((2,), jnp.float32)
        offset = jnp.zeros((2,), jnp.float32)
    return jnp.stack([scale, offset], axis=1)     # [2, 2]


def _choose_tile(B, max_tile):
    """Pick the batch tile TB (multiple of 128) and padded batch size."""
    TB = int(min(max_tile, _round_up(max(B, 1), _LANE)))
    B_pad = _round_up(B, TB)
    if B_pad // TB == 1 and B > 2 * _LANE:
        # Keep >= 2 grid steps so the "parallel" axis can shard across both
        # TensorCores on v7x (no cost on single-TC v5e/v6e).
        TB = _round_up(pl.cdiv(B, 2), _LANE)
        B_pad = 2 * TB
    return TB, B_pad


def generator_forward_t(z_t, packed, ranges=None, *, max_tile=8192):
    """Fast path: z_t is the latent in [2, B] layout (batch on the lane axis).

    Returns the generated points in the same [2, B] layout — no transposes
    anywhere. Keep the producer/consumer in this layout when possible (the
    latent is random, so generating it transposed is free). max_tile may be
    raised up to ~32768; per-tile VMEM use stays tiny on every generation.
    """
    wp, bp = packed
    z_t = z_t.astype(jnp.float32)
    B = z_t.shape[1]
    aff = _make_affine(ranges)

    TB, B_pad = _choose_tile(B, max_tile)
    if B_pad != B:
        z_t = jnp.pad(z_t, ((0, 0), (0, B_pad - B)))

    out_t = pl.pallas_call(
        _generator_kernel,
        out_shape=jax.ShapeDtypeStruct((2, B_pad), jnp.float32),
        grid=(B_pad // TB,),
        in_specs=[
            pl.BlockSpec((2, TB), lambda i: (0, i)),                      # z tile
            pl.BlockSpec((_NLAYERS, _FMAX, _FMAX), lambda i: (0, 0, 0)),  # weights (resident)
            pl.BlockSpec((_NLAYERS, _FMAX, 1), lambda i: (0, 0, 0)),      # biases (resident)
            pl.BlockSpec((2, 2), lambda i: (0, 0)),                       # affine (resident)
        ],
        out_specs=pl.BlockSpec((2, TB), lambda i: (0, i)),
        compiler_params=pltpu.CompilerParams(
            dimension_semantics=("parallel",)),
    )(z_t, wp, bp, aff)

    return out_t[:, :B]


def generator_forward(z, packed, ranges=None, *, max_tile=8192):
    """Module-layout wrapper: z is [B, 2], returns [B, 2].

    The two .T calls are pure layout plumbing for interface parity with the
    PyTorch module; prefer generator_forward_t with a [2, B] latent.
    """
    out_t = generator_forward_t(z.T, packed, ranges=ranges, max_tile=max_tile)
    return out_t.T


def _reference_forward(z, params, ranges=None, *, bf16_matmul=True):
    """Pure-JAX reference. With bf16_matmul=True it mirrors the kernel's
    numerics (bf16 MXU operands for layers 2..5, f32 layer 1 / activations)."""
    h = z.astype(jnp.float32)
    for l, (w, b) in enumerate(params):
        if l == 0 or not bf16_matmul:
            h = h @ w + b
        else:
            h = jnp.dot(h.astype(jnp.bfloat16), w.astype(jnp.bfloat16),
                        preferred_element_type=jnp.float32) + b
        h = jnp.maximum(h, 0.2 * h)
    y = jnp.tanh(h)
    if ranges is not None and len(ranges) > 0:
        lo, hi = ranges[:, 0], ranges[:, 1]
        y = lo[None, :] + (y + 1.0) * (hi - lo)[None, :] / 2.0
    return y


if __name__ == "__main__":
    key = jax.random.PRNGKey(0)
    kp, kz, kz2 = jax.random.split(key, 3)

    params = init_params(kp)
    packed = pack_params(params)

    # --- small batch, module [B, 2] layout, ranges=[] (raw tanh output) ---
    B = 8
    z = jax.random.normal(kz, (B, 2), jnp.float32)
    out = jax.block_until_ready(generator_forward(z, packed, ranges=None))
    assert out.shape == (B, 2) and out.dtype == jnp.float32
    ref = _reference_forward(z, params, None)
    np.testing.assert_allclose(np.asarray(out), np.asarray(ref), rtol=5e-3, atol=5e-3)

    # --- map_to_range branch (folded into the kernel epilogue) ---
    ranges = jnp.array([[-3.0, 3.0], [0.0, 10.0]], jnp.float32)
    out_r = jax.block_until_ready(generator_forward(z, packed, ranges=ranges))
    ref_r = _reference_forward(z, params, ranges)
    assert out_r.shape == (B, 2)
    np.testing.assert_allclose(np.asarray(out_r), np.asarray(ref_r), rtol=5e-3, atol=5e-3)

    # --- transpose-free fast path, multi-tile "parallel" grid (2 steps) ---
    B2 = 640
    z_t = jax.random.normal(kz2, (2, B2), jnp.float32)
    out_t = jax.block_until_ready(generator_forward_t(z_t, packed, ranges=None))
    assert out_t.shape == (2, B2)
    ref_t = _reference_forward(z_t.T, params, None).T
    np.testing.assert_allclose(np.asarray(out_t), np.asarray(ref_t), rtol=5e-3, atol=5e-3)

    print("KERNEL_OK")
</pallas_src>

<mosaic_0001>
module attributes {stable_mosaic.version = 11 : i64} {
  func.func @_generator_kernel(%arg0: i32, %arg1: memref<2x128xf32, #tpu.memory_space<vmem>>, %arg2: memref<5x32x32xf32, #tpu.memory_space<vmem>>, %arg3: memref<5x32x1xf32, #tpu.memory_space<vmem>>, %arg4: memref<2x2xf32, #tpu.memory_space<vmem>>, %arg5: memref<2x128xf32, #tpu.memory_space<vmem>>) attributes {dimension_semantics = [#tpu.dimension_semantics<parallel>], iteration_bounds = array<i64: 1>, scalar_prefetch = 0 : i64, scratch_operands = 0 : i64, tpu.core_type = #tpu.core_type<tc>, window_params = [{transform_indices = @transform_0, window_bounds = array<i64: 2, 128>}, {pipeline_mode = #tpu.pipeline_mode<synchronous>, transform_indices = @transform_1, window_bounds = array<i64: 5, 32, 32>}, {pipeline_mode = #tpu.pipeline_mode<synchronous>, transform_indices = @transform_2, window_bounds = array<i64: 5, 32, 1>}, {pipeline_mode = #tpu.pipeline_mode<synchronous>, transform_indices = @transform_3, window_bounds = array<i64: 2, 2>}, {transform_indices = @transform_4, window_bounds = array<i64: 2, 128>}]} {
    %c0 = arith.constant 0 : index
    %c0_0 = arith.constant 0 : index
    %0 = vector.load %arg1[%c0, %c0_0] : memref<2x128xf32, #tpu.memory_space<vmem>>, vector<2x128xf32>
    %c0_1 = arith.constant 0 : index
    %c0_2 = arith.constant 0 : index
    %c0_3 = arith.constant 0 : index
    %1 = vector.load %arg2[%c0_1, %c0_2, %c0_3] : memref<5x32x32xf32, #tpu.memory_space<vmem>>, vector<1x32x32xf32>
    %2 = vector.shape_cast %1 : vector<1x32x32xf32> to vector<32x32xf32>
    %3 = vector.extract_strided_slice %2 {offsets = [0, 0], sizes = [32, 1], strides = [1, 1]} : vector<32x32xf32> to vector<32x1xf32>
    %4 = vector.extract_strided_slice %0 {offsets = [0, 0], sizes = [1, 128], strides = [1, 1]} : vector<2x128xf32> to vector<1x128xf32>
    %5 = vector.broadcast %3 : vector<32x1xf32> to vector<32x128xf32>
    %6 = vector.broadcast %4 : vector<1x128xf32> to vector<32x128xf32>
    %7 = arith.mulf %5, %6 : vector<32x128xf32>
    %8 = vector.extract_strided_slice %2 {offsets = [0, 1], sizes = [32, 1], strides = [1, 1]} : vector<32x32xf32> to vector<32x1xf32>
    %9 = vector.extract_strided_slice %0 {offsets = [1, 0], sizes = [1, 128], strides = [1, 1]} : vector<2x128xf32> to vector<1x128xf32>
    %10 = vector.broadcast %8 : vector<32x1xf32> to vector<32x128xf32>
    %11 = vector.broadcast %9 : vector<1x128xf32> to vector<32x128xf32>
    %12 = arith.mulf %10, %11 : vector<32x128xf32>
    %13 = arith.addf %7, %12 : vector<32x128xf32>
    %c0_4 = arith.constant 0 : index
    %c0_5 = arith.constant 0 : index
    %c0_6 = arith.constant 0 : index
    %14 = vector.load %arg3[%c0_4, %c0_5, %c0_6] : memref<5x32x1xf32, #tpu.memory_space<vmem>>, vector<1x32x1xf32>
    %15 = vector.shape_cast %14 : vector<1x32x1xf32> to vector<32x1xf32>
    %16 = vector.broadcast %15 : vector<32x1xf32> to vector<32x128xf32>
    %17 = arith.addf %13, %16 : vector<32x128xf32>
    %cst = arith.constant 2.000000e-01 : f32
    %18 = vector.broadcast %cst : f32 to vector<32x128xf32>
    %19 = arith.mulf %18, %17 : vector<32x128xf32>
    %20 = arith.maximumf %17, %19 : vector<32x128xf32>
    %c1 = arith.constant 1 : index
    %c0_7 = arith.constant 0 : index
    %c0_8 = arith.constant 0 : index
    %21 = vector.load %arg2[%c1, %c0_7, %c0_8] : memref<5x32x32xf32, #tpu.memory_space<vmem>>, vector<1x32x32xf32>
    %22 = vector.shape_cast %21 : vector<1x32x32xf32> to vector<32x32xf32>
    %23 = arith.truncf %22 : vector<32x32xf32> to vector<32x32xbf16>
    %24 = arith.truncf %20 : vector<32x128xf32> to vector<32x128xbf16>
    %cst_9 = arith.constant dense<0.000000e+00> : vector<32x128xf32>
    %25 = tpu.matmul %23, %24, %cst_9 {dimension_numbers = #tpu.dot_dimension_numbers<[1], [0], [0], [1], [0, 0, 1, 1], [], []>} : vector<32x32xbf16>, vector<32x128xbf16>, vector<32x128xf32> -> vector<32x128xf32>
    %c1_10 = arith.constant 1 : index
    %c0_11 = arith.constant 0 : index
    %c0_12 = arith.constant 0 : index
    %26 = vector.load %arg3[%c1_10, %c0_11, %c0_12] : memref<5x32x1xf32, #tpu.memory_space<vmem>>, vector<1x32x1xf32>
    %27 = vector.shape_cast %26 : vector<1x32x1xf32> to vector<32x1xf32>
    %28 = vector.broadcast %27 : vector<32x1xf32> to vector<32x128xf32>
    %29 = arith.addf %25, %28 : vector<32x128xf32>
    %cst_13 = arith.constant 2.000000e-01 : f32
    %30 = vector.broadcast %cst_13 : f32 to vector<32x128xf32>
    %31 = arith.mulf %30, %29 : vector<32x128xf32>
    %32 = arith.maximumf %29, %31 : vector<32x128xf32>
    %c2 = arith.constant 2 : index
    %c0_14 = arith.constant 0 : index
    %c0_15 = arith.constant 0 : index
    %33 = vector.load %arg2[%c2, %c0_14, %c0_15] : memref<5x32x32xf32, #tpu.memory_space<vmem>>, vector<1x32x32xf32>
    %34 = vector.shape_cast %33 : vector<1x32x32xf32> to vector<32x32xf32>
    %35 = arith.truncf %34 : vector<32x32xf32> to vector<32x32xbf16>
    %36 = arith.truncf %32 : vector<32x128xf32> to vector<32x128xbf16>
    %cst_16 = arith.constant dense<0.000000e+00> : vector<32x128xf32>
    %37 = tpu.matmul %35, %36, %cst_16 {dimension_numbers = #tpu.dot_dimension_numbers<[1], [0], [0], [1], [0, 0, 1, 1], [], []>} : vector<32x32xbf16>, vector<32x128xbf16>, vector<32x128xf32> -> vector<32x128xf32>
    %c2_17 = arith.constant 2 : index
    %c0_18 = arith.constant 0 : index
    %c0_19 = arith.constant 0 : index
    %38 = vector.load %arg3[%c2_17, %c0_18, %c0_19] : memref<5x32x1xf32, #tpu.memory_space<vmem>>, vector<1x32x1xf32>
    %39 = vector.shape_cast %38 : vector<1x32x1xf32> to vector<32x1xf32>
    %40 = vector.broadcast %39 : vector<32x1xf32> to vector<32x128xf32>
    %41 = arith.addf %37, %40 : vector<32x128xf32>
    %cst_20 = arith.constant 2.000000e-01 : f32
    %42 = vector.broadcast %cst_20 : f32 to vector<32x128xf32>
    %43 = arith.mulf %42, %41 : vector<32x128xf32>
    %44 = arith.maximumf %41, %43 : vector<32x128xf32>
    %c3 = arith.constant 3 : index
    %c0_21 = arith.constant 0 : index
    %c0_22 = arith.constant 0 : index
    %45 = vector.load %arg2[%c3, %c0_21, %c0_22] : memref<5x32x32xf32, #tpu.memory_space<vmem>>, vector<1x32x32xf32>
    %46 = vector.shape_cast %45 : vector<1x32x32xf32> to vector<32x32xf32>
    %47 = arith.truncf %46 : vector<32x32xf32> to vector<32x32xbf16>
    %48 = arith.truncf %44 : vector<32x128xf32> to vector<32x128xbf16>
    %cst_23 = arith.constant dense<0.000000e+00> : vector<32x128xf32>
    %49 = tpu.matmul %47, %48, %cst_23 {dimension_numbers = #tpu.dot_dimension_numbers<[1], [0], [0], [1], [0, 0, 1, 1], [], []>} : vector<32x32xbf16>, vector<32x128xbf16>, vector<32x128xf32> -> vector<32x128xf32>
    %c3_24 = arith.constant 3 : index
    %c0_25 = arith.constant 0 : index
    %c0_26 = arith.constant 0 : index
    %50 = vector.load %arg3[%c3_24, %c0_25, %c0_26] : memref<5x32x1xf32, #tpu.memory_space<vmem>>, vector<1x32x1xf32>
    %51 = vector.shape_cast %50 : vector<1x32x1xf32> to vector<32x1xf32>
    %52 = vector.broadcast %51 : vector<32x1xf32> to vector<32x128xf32>
    %53 = arith.addf %49, %52 : vector<32x128xf32>
    %cst_27 = arith.constant 2.000000e-01 : f32
    %54 = vector.broadcast %cst_27 : f32 to vector<32x128xf32>
    %55 = arith.mulf %54, %53 : vector<32x128xf32>
    %56 = arith.maximumf %53, %55 : vector<32x128xf32>
    %c4 = arith.constant 4 : index
    %c0_28 = arith.constant 0 : index
    %c0_29 = arith.constant 0 : index
    %57 = vector.load %arg2[%c4, %c0_28, %c0_29] : memref<5x32x32xf32, #tpu.memory_space<vmem>>, vector<1x32x32xf32>
    %58 = vector.shape_cast %57 : vector<1x32x32xf32> to vector<32x32xf32>
    %59 = arith.truncf %58 : vector<32x32xf32> to vector<32x32xbf16>
    %60 = arith.truncf %56 : vector<32x128xf32> to vector<32x128xbf16>
    %cst_30 = arith.constant dense<0.000000e+00> : vector<32x128xf32>
    %61 = tpu.matmul %59, %60, %cst_30 {dimension_numbers = #tpu.dot_dimension_numbers<[1], [0], [0], [1], [0, 0, 1, 1], [], []>} : vector<32x32xbf16>, vector<32x128xbf16>, vector<32x128xf32> -> vector<32x128xf32>
    %c4_31 = arith.constant 4 : index
    %c0_32 = arith.constant 0 : index
    %c0_33 = arith.constant 0 : index
    %62 = vector.load %arg3[%c4_31, %c0_32, %c0_33] : memref<5x32x1xf32, #tpu.memory_space<vmem>>, vector<1x32x1xf32>
    %63 = vector.shape_cast %62 : vector<1x32x1xf32> to vector<32x1xf32>
    %64 = vector.broadcast %63 : vector<32x1xf32> to vector<32x128xf32>
    %65 = arith.addf %61, %64 : vector<32x128xf32>
    %cst_34 = arith.constant 2.000000e-01 : f32
    %66 = vector.broadcast %cst_34 : f32 to vector<32x128xf32>
    %67 = arith.mulf %66, %65 : vector<32x128xf32>
    %68 = arith.maximumf %65, %67 : vector<32x128xf32>
    %69 = vector.extract_strided_slice %68 {offsets = [0, 0], sizes = [2, 128], strides = [1, 1]} : vector<32x128xf32> to vector<2x128xf32>
    %70 = math.tanh %69 : vector<2x128xf32>
    %c0_35 = arith.constant 0 : index
    %c0_36 = arith.constant 0 : index
    %71 = vector.load %arg4[%c0_35, %c0_36] : memref<2x2xf32, #tpu.memory_space<vmem>>, vector<2x1xf32>
    %c0_37 = arith.constant 0 : index
    %c1_38 = arith.constant 1 : index
    %72 = vector.load %arg4[%c0_37, %c1_38] : memref<2x2xf32, #tpu.memory_space<vmem>>, vector<2x1xf32>
    %73 = vector.broadcast %71 : vector<2x1xf32> to vector<2x128xf32>
    %74 = arith.mulf %70, %73 : vector<2x128xf32>
    %75 = vector.broadcast %72 : vector<2x1xf32> to vector<2x128xf32>
    %76 = arith.addf %74, %75 : vector<2x128xf32>
    %c0_39 = arith.constant 0 : index
    %c0_40 = arith.constant 0 : index
    %77 = vector.load %arg5[%c0_39, %c0_40] : memref<2x128xf32, #tpu.memory_space<vmem>>, vector<2x128xf32>
    tpu.vector_store %arg5[%c0_39, %c0_40], %76 {strides = array<i32>} : memref<2x128xf32, #tpu.memory_space<vmem>>, vector<2x128xf32>,
    return
  }
  func.func @transform_0(%arg0: i32) -> (i32, i32) {
    %c0_i32 = arith.constant 0 : i32
    %c0_i32_0 = arith.constant 0 : i32
    return %c0_i32, %arg0 : i32, i32
  }
  func.func @transform_1(%arg0: i32) -> (i32, i32, i32) {
    %c0_i32 = arith.constant 0 : i32
    %c0_i32_0 = arith.constant 0 : i32
    %c0_i32_1 = arith.constant 0 : i32
    %c0_i32_2 = arith.constant 0 : i32
    return %c0_i32, %c0_i32_0, %c0_i32_1 : i32, i32, i32
  }
  func.func @transform_2(%arg0: i32) -> (i32, i32, i32) {
    %c0_i32 = arith.constant 0 : i32
    %c0_i32_0 = arith.constant 0 : i32
    %c0_i32_1 = arith.constant 0 : i32
    %c0_i32_2 = arith.constant 0 : i32
    return %c0_i32, %c0_i32_0, %c0_i32_1 : i32, i32, i32
  }
  func.func @transform_3(%arg0: i32) -> (i32, i32) {
    %c0_i32 = arith.constant 0 : i32
    %c0_i32_0 = arith.constant 0 : i32
    %c0_i32_1 = arith.constant 0 : i32
    return %c0_i32, %c0_i32_0 : i32, i32
  }
  func.func @transform_4(%arg0: i32) -> (i32, i32) {
    %c0_i32 = arith.constant 0 : i32
    %c0_i32_0 = arith.constant 0 : i32
    return %c0_i32, %arg0 : i32, i32
  }
}

</mosaic_0001>

<llo_original>
// kernel: tpu_custom_call.1
$region0: #{tpu_custom_call.1}
  #allocation0 [shape = 'u32[]', space=smem, size = 0x4, offset = 0x4, fixed_abs, tag = 'smem constant byte address 0x4 - core index']
  #allocation1 [shape = 'u32[72,128]{1,0:T(1,128)}', space=vmem, size = 0x9000, scoped, tag = 'internal scratch']
  %s0 = inlined_call_operand.vmem [shape: f32[2,128], index: 0, kind: input, shape index: {}]
  %s1 = inlined_call_operand.vmem [shape: f32[5,32,32], index: 1, kind: input, shape index: {}]
  %s2 = inlined_call_operand.vmem [shape: f32[5,32,1], index: 2, kind: input, shape index: {}]
  %s3 = inlined_call_operand.vmem [shape: f32[2,2], index: 3, kind: input, shape index: {}]
  %s4 = inlined_call_operand.hbm [shape: f32[2,128], index: 4, kind: output, shape index: {}]
  %s5 = sld [smem:[#allocation0]]
  $region26: #{tpu_custom_call.1} parent=0
    _
  %s7 = ssub.s32 1, %s5
  %s8 = scalar_select 0, %s7, %s5
  $region1: #{tpu_custom_call.1} parent=0
    #allocation2 [shape = 'u8[1024]{0}', space=vmem, size = 0x400, scoped, tag = 'output window, operand 0, single buffered']
    #allocation3 [shape = 's32[1]{0}', space=sflag, size = 0x4, scoped, tag = 'scoped memory for tpu_custom_call.1']
    %9 = vsyncpa [#allocation3], 0
    // Predicated region
    $region2: #{tpu_custom_call.1} parent=1 // pred_check
      _
    $region3: #{tpu_custom_call.1} parent=1 // pred_check_branch
      %11 = sbr.rel (0) target = $region5
    $region4: #{tpu_custom_call.1} parent=1 // pred_region
      _
    $region5: #{tpu_custom_call.1} parent=1 // pred_fallthru
      _
    // Predicated region
    $region6: #{tpu_custom_call.1} parent=1 // pred_check
      _
    $region7: #{tpu_custom_call.1} parent=1 // pred_check_branch
      %13 = sbr.rel (0) target = $region9
    $region8: #{tpu_custom_call.1} parent=1 // pred_region
      _
    $region9: #{tpu_custom_call.1} parent=1 // pred_fallthru
      _
    // Predicated region
    $region10: #{tpu_custom_call.1} parent=1 // pred_check
      _
    $region11: #{tpu_custom_call.1} parent=1 // pred_check_branch
      %15 = sbr.rel (0) target = $region13
    $region12: #{tpu_custom_call.1} parent=1 // pred_region
      _
    $region13: #{tpu_custom_call.1} parent=1 // pred_fallthru
      _
    // Predicated region
    $region14: #{tpu_custom_call.1} parent=1 // pred_check
      _
    $region15: #{tpu_custom_call.1} parent=1 // pred_check_branch
      %17 = sbr.rel (0) target = $region17
    $region16: #{tpu_custom_call.1} parent=1 // pred_region
      _
    $region17: #{tpu_custom_call.1} parent=1 // pred_fallthru
      _
    %v19 = vld [vmem:[%s0] sm:$0x3]
    %v20 = vld [vmem:[%s1] sm:$0xff]
    %v21 = vld [vmem:[%s1 + $0x8] sm:$0xff]
    %v22 = vld [vmem:[%s1 + $0x10] sm:$0xff]
    %v23 = vld [vmem:[%s1 + $0x18] sm:$0xff]
    %25 = vset.pattern.permute.xlu0 0
    %26 = vperm.xlu0 %25, %v20
    %v27 = vpop.permute.xlu0 %26
    %30 = vset.pattern.permute.xlu0 0
    %31 = vperm.xlu0 %30, %v21
    %v32 = vpop.permute.xlu0 %31
    %35 = vset.pattern.permute.xlu0 0
    %36 = vperm.xlu0 %35, %v22
    %v37 = vpop.permute.xlu0 %36
    %40 = vset.pattern.permute.xlu0 0
    %41 = vperm.xlu0 %40, %v23
    %v42 = vpop.permute.xlu0 %41
    %v44 = vperm.slane %v19, 0
    %v45 = vmul.f32 %v27, %v44
    %v46 = vmul.f32 %v32, %v44
    %v47 = vmul.f32 %v37, %v44
    %v48 = vmul.f32 %v42, %v44
    %49 = vset.pattern.permute.xlu0 1
    %50 = vperm.xlu0 %49, %v20
    %v51 = vpop.permute.xlu0 %50
    %53 = vset.pattern.permute.xlu0 1
    %54 = vperm.xlu0 %53, %v21
    %v55 = vpop.permute.xlu0 %54
    %57 = vset.pattern.permute.xlu0 1
    %58 = vperm.xlu0 %57, %v22
    %v59 = vpop.permute.xlu0 %58
    %61 = vset.pattern.permute.xlu0 1
    %62 = vperm.xlu0 %61, %v23
    %v63 = vpop.permute.xlu0 %62
    %v65 = vperm.slane %v19, 1
    %v66 = vmul.f32 %v51, %v65
    %v67 = vmul.f32 %v55, %v65
    %v68 = vmul.f32 %v59, %v65
    %v69 = vmul.f32 %v63, %v65
    %v70 = vadd.f32 %v45, %v66
    %v71 = vadd.f32 %v46, %v67
    %v72 = vadd.f32 %v47, %v68
    %v73 = vadd.f32 %v48, %v69
    %v74 = vld [vmem:[%s2] sm:$0xff]
    %v75 = vld [vmem:[%s2 + $0x8] sm:$0xff]
    %v76 = vld [vmem:[%s2 + $0x10] sm:$0xff]
    %v77 = vld [vmem:[%s2 + $0x18] sm:$0xff]
    %79 = vset.pattern.permute.xlu0 0
    %80 = vperm.xlu0 %79, %v74
    %v81 = vpop.permute.xlu0 %80
    %84 = vset.pattern.permute.xlu0 0
    %85 = vperm.xlu0 %84, %v75
    %v86 = vpop.permute.xlu0 %85
    %89 = vset.pattern.permute.xlu0 0
    %90 = vperm.xlu0 %89, %v76
    %v91 = vpop.permute.xlu0 %90
    %94 = vset.pattern.permute.xlu0 0
    %95 = vperm.xlu0 %94, %v77
    %v96 = vpop.permute.xlu0 %95
    %v98 = vadd.f32 %v70, %v81
    %v99 = vadd.f32 %v71, %v86
    %v100 = vadd.f32 %v72, %v91
    %v101 = vadd.f32 %v73, %v96
    %v102 = vmul.f32 %v98, 0.2
    %v103 = vmul.f32 %v99, 0.2
    %v104 = vmul.f32 %v100, 0.2
    %v105 = vmul.f32 %v101, 0.2
    %v106 = vmax.f32 %v98, %v102
    %v107 = vmax.f32 %v99, %v103
    %v108 = vmax.f32 %v100, %v104
    %v109 = vmax.f32 %v101, %v105
    %s110 = scalar_lea.vmem %s1, 32
    %v111 = vld [vmem:[%s110] sm:$0xff]
    %v112 = vld [vmem:[%s110 + $0x8] sm:$0xff]
    %v113 = vld [vmem:[%s110 + $0x10] sm:$0xff]
    %v114 = vld [vmem:[%s110 + $0x18] sm:$0xff]
    %v115 = vpack.c.bf16 %v112, %v111
    %v116 = vpack.c.bf16 %v114, %v113
    %v117 = vpack.c.bf16 %v107, %v106
    %v118 = vpack.c.bf16 %v109, %v108
    %s119 = scalar_lea.vmem %s2, 32
    %v120 = vld [vmem:[%s119] sm:$0xff]
    %v121 = vld [vmem:[%s119 + $0x8] sm:$0xff]
    %v122 = vld [vmem:[%s119 + $0x10] sm:$0xff]
    %v123 = vld [vmem:[%s119 + $0x18] sm:$0xff]
    %125 = vset.pattern.permute.xlu0 0
    %126 = vperm.xlu0 %125, %v120
    %v127 = vpop.permute.xlu0 %126
    %130 = vset.pattern.permute.xlu0 0
    %131 = vperm.xlu0 %130, %v121
    %v132 = vpop.permute.xlu0 %131
    %135 = vset.pattern.permute.xlu0 0
    %136 = vperm.xlu0 %135, %v122
    %v137 = vpop.permute.xlu0 %136
    %140 = vset.pattern.permute.xlu0 0
    %141 = vperm.xlu0 %140, %v123
    %v142 = vpop.permute.xlu0 %141
    %vm144 = vcmask 261120
    %v146 = vsel %vm144, %v115, 0
    %v149 = vsel %vm144, %v116, 0
    %151 = vmatpush.bf16.msra.mxu0 0
    %152 = vmatpush.bf16.msra.mxu0 0
    %153 = vmatpush.bf16.msra.mxu0 0
    %154 = vmatpush.bf16.msra.mxu0 0
    %155 = vmatpush.bf16.msra.mxu0 0
    %156 = vmatpush.bf16.msra.mxu0 0
    %157 = vmatpush.bf16.msra.mxu0 %v118
    %158 = vmatpush.bf16.msra.mxu0 %v117
    %159 = vmatmul.bf16.gmra.mxu0 %v146
    %v160 = vpop.f32.mrf.mxu0
    %v161 = vadd.f32 %v127, %v160
    %v162 = vpop.f32.mrf.mxu0
    %v163 = vadd.f32 %v132, %v162
    %164 = vmatmul.bf16.gmra.mxu0 %v149
    %v165 = vpop.f32.mrf.mxu0
    %v166 = vadd.f32 %v137, %v165
    %v167 = vpop.f32.mrf.mxu0
    %v168 = vadd.f32 %v142, %v167
    %169 = vdwg.mxu0
    %v170 = vmul.f32 %v161, 0.2
    %v171 = vmul.f32 %v163, 0.2
    %v172 = vmul.f32 %v166, 0.2
    %v173 = vmul.f32 %v168, 0.2
    %v174 = vmax.f32 %v161, %v170
    %v175 = vmax.f32 %v163, %v171
    %v176 = vmax.f32 %v166, %v172
    %v177 = vmax.f32 %v168, %v173
    %s178 = scalar_lea.vmem %s1, 64
    %v179 = vld [vmem:[%s178] sm:$0xff]
    %v180 = vld [vmem:[%s178 + $0x8] sm:$0xff]
    %v181 = vld [vmem:[%s178 + $0x10] sm:$0xff]
    %v182 = vld [vmem:[%s178 + $0x18] sm:$0xff]
    %v183 = vpack.c.bf16 %v180, %v179
    %v184 = vpack.c.bf16 %v182, %v181
    %v185 = vpack.c.bf16 %v175, %v174
    %v186 = vpack.c.bf16 %v177, %v176
    %s187 = scalar_lea.vmem %s2, 64
    %v188 = vld [vmem:[%s187] sm:$0xff]
    %v189 = vld [vmem:[%s187 + $0x8] sm:$0xff]
    %v190 = vld [vmem:[%s187 + $0x10] sm:$0xff]
    %v191 = vld [vmem:[%s187 + $0x18] sm:$0xff]
    %193 = vset.pattern.permute.xlu0 0
    %194 = vperm.xlu0 %193, %v188
    %v195 = vpop.permute.xlu0 %194
    %198 = vset.pattern.permute.xlu0 0
    %199 = vperm.xlu0 %198, %v189
    %v200 = vpop.permute.xlu0 %199
    %203 = vset.pattern.permute.xlu0 0
    %204 = vperm.xlu0 %203, %v190
    %v205 = vpop.permute.xlu0 %204
    %208 = vset.pattern.permute.xlu0 0
    %209 = vperm.xlu0 %208, %v191
    %v210 = vpop.permute.xlu0 %209
    %v213 = vsel %vm144, %v183, 0
    %v216 = vsel %vm144, %v184, 0
    %218 = vmatpush.bf16.msra.mxu0 0
    %219 = vmatpush.bf16.msra.mxu0 0
    %220 = vmatpush.bf16.msra.mxu0 0
    %221 = vmatpush.bf16.msra.mxu0 0
    %222 = vmatpush.bf16.msra.mxu0 0
    %223 = vmatpush.bf16.msra.mxu0 0
    %224 = vmatpush.bf16.msra.mxu0 %v186
    %225 = vmatpush.bf16.msra.mxu0 %v185
    %226 = vmatmul.bf16.gmra.mxu0 %v213
    %v227 = vpop.f32.mrf.mxu0
    %v228 = vadd.f32 %v195, %v227
    %v229 = vpop.f32.mrf.mxu0
    %v230 = vadd.f32 %v200, %v229
    %231 = vmatmul.bf16.gmra.mxu0 %v216
    %v232 = vpop.f32.mrf.mxu0
    %v233 = vadd.f32 %v205, %v232
    %v234 = vpop.f32.mrf.mxu0
    %v235 = vadd.f32 %v210, %v234
    %236 = vdwg.mxu0
    %v237 = vmul.f32 %v228, 0.2
    %v238 = vmul.f32 %v230, 0.2
    %v239 = vmul.f32 %v233, 0.2
    %v240 = vmul.f32 %v235, 0.2
    %v241 = vmax.f32 %v228, %v237
    %v242 = vmax.f32 %v230, %v238
    %v243 = vmax.f32 %v233, %v239
    %v244 = vmax.f32 %v235, %v240
    %s245 = scalar_lea.vmem %s1, 96
    %v246 = vld [vmem:[%s245] sm:$0xff]
    %v247 = vld [vmem:[%s245 + $0x8] sm:$0xff]
    %v248 = vld [vmem:[%s245 + $0x10] sm:$0xff]
    %v249 = vld [vmem:[%s245 + $0x18] sm:$0xff]
    %v250 = vpack.c.bf16 %v247, %v246
    %v251 = vpack.c.bf16 %v249, %v248
    %v252 = vpack.c.bf16 %v242, %v241
    %v253 = vpack.c.bf16 %v244, %v243
    %s254 = scalar_lea.vmem %s2, 96
    %v255 = vld [vmem:[%s254] sm:$0xff]
    %v256 = vld [vmem:[%s254 + $0x8] sm:$0xff]
    %v257 = vld [vmem:[%s254 + $0x10] sm:$0xff]
    %v258 = vld [vmem:[%s254 + $0x18] sm:$0xff]
    %260 = vset.pattern.permute.xlu0 0
    %261 = vperm.xlu0 %260, %v255
    %v262 = vpop.permute.xlu0 %261
    %265 = vset.pattern.permute.xlu0 0
    %266 = vperm.xlu0 %265, %v256
    %v267 = vpop.permute.xlu0 %266
    %270 = vset.pattern.permute.xlu0 0
    %271 = vperm.xlu0 %270, %v257
    %v272 = vpop.permute.xlu0 %271
    %275 = vset.pattern.permute.xlu0 0
    %276 = vperm.xlu0 %275, %v258
    %v277 = vpop.permute.xlu0 %276
    %v280 = vsel %vm144, %v250, 0
    %v283 = vsel %vm144, %v251, 0
    %285 = vmatpush.bf16.msra.mxu0 0
    %286 = vmatpush.bf16.msra.mxu0 0
    %287 = vmatpush.bf16.msra.mxu0 0
    %288 = vmatpush.bf16.msra.mxu0 0
    %289 = vmatpush.bf16.msra.mxu0 0
    %290 = vmatpush.bf16.msra.mxu0 0
    %291 = vmatpush.bf16.msra.mxu0 %v253
    %292 = vmatpush.bf16.msra.mxu0 %v252
    %293 = vmatmul.bf16.gmra.mxu0 %v280
    %v294 = vpop.f32.mrf.mxu0
    %v295 = vadd.f32 %v262, %v294
    %v296 = vpop.f32.mrf.mxu0
    %v297 = vadd.f32 %v267, %v296
    %298 = vmatmul.bf16.gmra.mxu0 %v283
    %v299 = vpop.f32.mrf.mxu0
    %v300 = vadd.f32 %v272, %v299
    %v301 = vpop.f32.mrf.mxu0
    %v302 = vadd.f32 %v277, %v301
    %303 = vdwg.mxu0
    %v304 = vmul.f32 %v295, 0.2
    %v305 = vmul.f32 %v297, 0.2
    %v306 = vmul.f32 %v300, 0.2
    %v307 = vmul.f32 %v302, 0.2
    %v308 = vmax.f32 %v295, %v304
    %v309 = vmax.f32 %v297, %v305
    %v310 = vmax.f32 %v300, %v306
    %v311 = vmax.f32 %v302, %v307
    %s312 = scalar_lea.vmem %s1, 128
    %v313 = vld [vmem:[%s312] sm:$0xff]
    %v314 = vld [vmem:[%s312 + $0x8] sm:$0xff]
    %v315 = vld [vmem:[%s312 + $0x10] sm:$0xff]
    %v316 = vld [vmem:[%s312 + $0x18] sm:$0xff]
    %v317 = vpack.c.bf16 %v314, %v313
    %v318 = vpack.c.bf16 %v316, %v315
    %v319 = vpack.c.bf16 %v309, %v308
    %v320 = vpack.c.bf16 %v311, %v310
    %s321 = scalar_lea.vmem %s2, 128
    %v322 = vld [vmem:[%s321] sm:$0xff]
    %v323 = vld [vmem:[%s321 + $0x8] sm:$0xff]
    %v324 = vld [vmem:[%s321 + $0x10] sm:$0xff]
    %v325 = vld [vmem:[%s321 + $0x18] sm:$0xff]
    %327 = vset.pattern.permute.xlu0 0
    %328 = vperm.xlu0 %327, %v322
    %v329 = vpop.permute.xlu0 %328
    %332 = vset.pattern.permute.xlu0 0
    %333 = vperm.xlu0 %332, %v323
    %v334 = vpop.permute.xlu0 %333
    %336 = vset.pattern.permute.xlu0 0
    %337 = vperm.xlu0 %336, %v324
    %v338 = vpop.permute.xlu0 %337
    %340 = vset.pattern.permute.xlu0 0
    %341 = vperm.xlu0 %340, %v325
    %v342 = vpop.permute.xlu0 %341
    %v344 = vsel %vm144, %v317, 0
    %v347 = vsel %vm144, %v318, 0
    %349 = vmatpush.bf16.msra.mxu0 0
    %350 = vmatpush.bf16.msra.mxu0 0
    %351 = vmatpush.bf16.msra.mxu0 0
    %352 = vmatpush.bf16.msra.mxu0 0
    %353 = vmatpush.bf16.msra.mxu0 0
    %354 = vmatpush.bf16.msra.mxu0 0
    %355 = vmatpush.bf16.msra.mxu0 %v320
    %356 = vmatpush.bf16.msra.mxu0 %v319
    %357 = vmatmul.bf16.gmra.mxu0 %v344
    %v358 = vpop.f32.mrf.mxu0
    %v359 = vadd.f32 %v329, %v358
    %v360 = vpop.f32.mrf.mxu0
    %361 = vmatmul.bf16.gmra.mxu0 %v347
    %v362 = vpop.f32.mrf.mxu0
    %v363 = vpop.f32.mrf.mxu0
    %364 = vdwg.mxu0
    %v365 = vmul.f32 %v359, 0.2
    %v366 = vmax.f32 %v359, %v365
    %v367 = vtanh.pop %v366
    %v368 = vld [vmem:[%s3] sm:$0x3]
    %370 = vset.pattern.permute.xlu0 0
    %371 = vperm.xlu0 %370, %v368
    %v372 = vpop.permute.xlu0 %371
    %v374 = vmul.f32 %v367, %v372
    %375 = vset.pattern.permute.xlu0 1
    %376 = vperm.xlu0 %375, %v368
    %v377 = vpop.permute.xlu0 %376
    %v379 = vadd.f32 %v374, %v377
    %380 = vst [vmem:[#allocation2] sm:$0x3] %v379
    // Predicated region
    $region18: #{tpu_custom_call.1} parent=1 // pred_check
      _
    $region19: #{tpu_custom_call.1} parent=1 // pred_check_branch
      %382 = sbr.rel (0) target = $region21
    $region20: #{tpu_custom_call.1} parent=1 // pred_region
      %384 = vsyncadd [#allocation3], 0
      %s386 = sshll.u32 [#allocation2], 4
      %s387 = int_to_ptr.vmem [resolvable:$true] %s386
      %s388 = sshll.u32 %s4, 4
      %s389 = int_to_ptr.hbm [resolvable:$true] %s388
      %391 = dma.vmem_to_hbm [thread:$0]  %s387, 32, %s389, [#allocation3]
    $region21: #{tpu_custom_call.1} parent=1 // pred_fallthru
      _
    // Predicated region
    $region22: #{tpu_custom_call.1} parent=1 // pred_check
      _
    $region23: #{tpu_custom_call.1} parent=1 // pred_check_branch
      %393 = sbr.rel (0) target = $region25
    $region24: #{tpu_custom_call.1} parent=1 // pred_region
      %395 = dma.done [#allocation3], 32
    $region25: #{tpu_custom_call.1} parent=1 // pred_fallthru
      _
    %396 = vsyncpa [#allocation3], 1

</llo_original>
